<compile_context>
chip_gen: v5e
topology: v5e:2x2
jax: 0.10.0
libtpu: 0.0.40
codegen_flags: <defaults>
</compile_context>

<pallas_src>
import functools

import jax
import jax.numpy as jnp
from jax.experimental import pallas as pl
from jax.experimental.pallas import tpu as pltpu


# ------------------------- glue (plain JAX, not the hot path) -----------------------

def knn_idx(xyz, k):
    # xyz: (B, N, 3) -> neighbor indices (B, N, k)  (self excluded, as in torch code)
    inner = jnp.einsum("bnc,bmc->bnm", xyz, xyz)
    quad = jnp.sum(xyz ** 2, axis=-1)                      # (B, N)
    dist = -2.0 * inner + quad[:, None, :] + quad[:, :, None]
    _, idx = jax.lax.top_k(-dist, k + 1)                   # smallest k+1 distances
    return idx[:, :, 1:]


def farthest_point_sample(xyz, n_samples):
    # TODO(synk): reference seeds FPS with torch.randint (nondeterministic);
    # we deterministically start from point index 0 of every batch.
    B, N, _ = xyz.shape

    def body(i, state):
        centroids, distance, farthest = state
        centroids = centroids.at[:, i].set(farthest)
        centroid = jnp.take_along_axis(xyz, farthest[:, None, None], axis=1)  # (B,1,3)
        dist = jnp.sum((xyz - centroid) ** 2, axis=-1)
        distance = jnp.where(dist < distance, dist, distance)
        farthest = jnp.argmax(distance, axis=-1).astype(jnp.int32)
        return centroids, distance, farthest

    centroids = jnp.zeros((B, n_samples), dtype=jnp.int32)
    distance = jnp.full((B, N), 1e10, dtype=jnp.float32)
    farthest = jnp.zeros((B,), dtype=jnp.int32)
    centroids, _, _ = jax.lax.fori_loop(0, n_samples, body,
                                        (centroids, distance, farthest))
    return centroids


def index_points(points, idx):
    # points: (B, N, C); idx: (B, ...) -> (B, ..., C)
    B = points.shape[0]
    batch_idx = jnp.arange(B).reshape((B,) + (1,) * (idx.ndim - 1))
    return points[batch_idx, idx]


# ------------------------------ Pallas kernel ----------------------------------------

def _sa_mlp_kernel(num_layers, K, cin, x_ref, *refs):
    """Fused pointwise-MLP + max-over-neighbors for one (batch, S-tile) block.

    x_ref : (1, K, tS, Cin)  bf16, K-leading grouped features (true Cin, no HBM pad)
    refs  : W1, shift1, ..., Wn, shiftn, out_ref, pad_ref
            Wl     : (Cprev_pad, Cout_pad) bf16, BN scale pre-folded
            shiftl : (1, Cout_pad)         f32
            out    : (1, tS, Cout_pad)     f32
            pad    : (tS, round_up(Cin,128)) bf16 VMEM scratch (lane pad, layer 1)
    """
    params = refs[:2 * num_layers]
    out_ref = refs[2 * num_layers]
    pad_ref = refs[2 * num_layers + 1]

    # Hoist the (small, VMEM-resident) parameter loads out of the K loop.
    ws = [params[2 * l][...] for l in range(num_layers)]
    shs = [params[2 * l + 1][...] for l in range(num_layers)]

    need_lane_pad = (cin % 128) != 0
    if need_lane_pad:
        # Zero once per block; only lanes [:cin] get overwritten below, so the
        # padding lanes stay exactly zero (padded W rows are zero too).
        pad_ref[...] = jnp.zeros_like(pad_ref)

    # Per-K-slab MLP + running max: peak live activation is (tS, C), not (K*tS, C).
    m = None
    for k in range(K):
        if need_lane_pad:
            pad_ref[:, :cin] = x_ref[0, k]          # masked lane store (vst.msk)
            h = pad_ref[...]                        # (tS, 128*) bf16, zero-padded lanes
        else:
            h = x_ref[0, k]
        for l in range(num_layers):
            acc = jnp.dot(h, ws[l], preferred_element_type=jnp.float32)
            acc = jnp.maximum(acc + shs[l], 0.0)    # f32 epilogue (v5e-safe)
            h = acc if l == num_layers - 1 else acc.astype(jnp.bfloat16)
        m = h if k == 0 else jnp.maximum(m, h)      # fused neighbor-max (pure VPU)
    out_ref[...] = m[None].astype(out_ref.dtype)


def _round_up(x, m):
    return ((x + m - 1) // m) * m


def _cdiv(a, b):
    return -(-a // b)


def sa_mlp_pallas(new_fea_kf, weights, shifts, *, tile_s=512):
    """new_fea_kf: (B, K, S, Cin) float -> (B, S, Cout) f32.

    weights[l]: (Cprev, Cout_l) with the BN scale already folded in;
    shifts[l]:  (Cout_l,).
    """
    B, K, S, Cin = new_fea_kf.shape
    num_layers = len(weights)
    Cout = weights[-1].shape[1]
    cin_lhs = _round_up(Cin, 128)       # in-kernel padded contraction for layer 1

    # S tile: multiple of 16 (bf16 sublane pack).  Shrink if the parallel grid
    # would leave a v7x TensorCore idle (aim for >= 4 programs when possible).
    t_s = min(_round_up(tile_s, 16), _round_up(S, 16))
    while t_s > 64 and B * _cdiv(S, t_s) < 4:
        t_s = _round_up(max(t_s // 2, 16), 16)
    s_pad = _round_up(S, t_s)

    # Only layout plumbing left wrapper-side: bf16 cast (fuses into the gather)
    # and a < tS-row S pad.  No channel pad, no (B,S,K,C) transpose.
    x = new_fea_kf.astype(jnp.bfloat16)
    if s_pad != S:
        x = jnp.pad(x, ((0, 0), (0, 0), (0, s_pad - S), (0, 0)))

    # Pad params to lane-dense 128 output channels.  Padded shift lanes are 0 so
    # relu(0+0)=0, and zero-padded W rows of later layers keep the padding inert.
    w_pad, sh_pad = [], []
    prev_pad = cin_lhs
    for w, sh in zip(weights, shifts):
        c_in_l, c_out_l = w.shape
        c_out_pad = _round_up(c_out_l, 128)
        wp = jnp.zeros((prev_pad, c_out_pad), jnp.bfloat16)
        wp = wp.at[:c_in_l, :c_out_l].set(w.astype(jnp.bfloat16))
        shp = jnp.zeros((1, c_out_pad), jnp.float32)
        shp = shp.at[0, :c_out_l].set(sh.astype(jnp.float32))
        w_pad.append(wp)
        sh_pad.append(shp)
        prev_pad = c_out_pad
    cout_pad = prev_pad

    in_specs = [pl.BlockSpec((1, K, t_s, Cin), lambda b, s: (b, 0, s, 0))]
    args = [x]
    for wp, shp in zip(w_pad, sh_pad):
        # Constant block index across the grid: weights stay resident in VMEM.
        in_specs.append(pl.BlockSpec(wp.shape, lambda b, s: (0, 0)))
        in_specs.append(pl.BlockSpec(shp.shape, lambda b, s: (0, 0)))
        args += [wp, shp]

    # Advisory cost estimate for XLA scheduling around the custom call.
    flops = 0
    prev = cin_lhs
    for wp in w_pad:
        flops += 2 * B * s_pad * K * prev * wp.shape[1]
        prev = wp.shape[1]
    param_bytes = sum(int(wp.size) * 2 + int(shp.size) * 4
                      for wp, shp in zip(w_pad, sh_pad))
    bytes_accessed = (B * K * s_pad * Cin * 2          # bf16 grouped input
                      + B * s_pad * cout_pad * 4       # f32 output
                      + param_bytes)

    # Explicit scoped-VMEM cap.  After the per-K-slab fusion the per-step need is
    # tiny, so this is comfortably below v7x's 64 MiB physical VMEM as well.
    per_step = (2 * K * t_s * Cin * 2                  # x double buffer
                + 2 * t_s * cout_pad * 4               # out double buffer
                + t_s * cin_lhs * 2                    # lane-pad scratch
                + 2 * param_bytes)
    vmem_limit = int(min(64 * 2 ** 20, max(32 * 2 ** 20, 2 * per_step)))

    out = pl.pallas_call(
        functools.partial(_sa_mlp_kernel, num_layers, K, Cin),
        grid=(B, s_pad // t_s),
        in_specs=in_specs,
        out_specs=pl.BlockSpec((1, t_s, cout_pad), lambda b, s: (b, s, 0)),
        out_shape=jax.ShapeDtypeStruct((B, s_pad, cout_pad), jnp.float32),
        scratch_shapes=[pltpu.VMEM((t_s, cin_lhs), jnp.bfloat16)],
        compiler_params=pltpu.CompilerParams(
            dimension_semantics=("parallel", "parallel"),
            vmem_limit_bytes=vmem_limit),
        cost_estimate=pl.CostEstimate(
            flops=flops, transcendentals=0, bytes_accessed=bytes_accessed),
    )(*args)
    return out[:, :S, :Cout]


# --------------------------- module-level forward -------------------------------------

def set_abstraction_forward(xyz, points, n_center, n_near, weights, shifts):
    """xyz: (B, 3, N); points: (B, D, N) or None.
    Returns (new_xyz (B, 3, S), new_points (B, Cout, S))."""
    xyz_t = jnp.transpose(xyz, (0, 2, 1)).astype(jnp.float32)        # (B, N, 3)
    fea = None if points is None else jnp.transpose(points, (0, 2, 1)).astype(jnp.float32)

    idx_all = knn_idx(xyz_t, n_near)                                 # (B, N, k)
    if n_center is None:
        new_xyz = xyz_t
        idx = idx_all
    else:
        fps_idx = farthest_point_sample(xyz_t, n_center)             # (B, S)
        new_xyz = index_points(xyz_t, fps_idx)                       # (B, S, 3)
        idx = index_points(idx_all, fps_idx)                         # (B, S, k)

    # K-leading grouping: transpose the tiny idx array, not the big grouped tensor,
    # so the gather emits the kernel's (B, K, S, C) layout directly.
    idx_k = jnp.transpose(idx, (0, 2, 1))                            # (B, K, S)
    grouped_xyz = index_points(xyz_t, idx_k)                         # (B, K, S, 3)
    grouped_xyz_norm = grouped_xyz - new_xyz[:, None, :, :]
    if fea is not None:
        grouped_fea = index_points(fea, idx_k)                       # (B, K, S, D)
        new_fea = jnp.concatenate([grouped_xyz_norm, grouped_fea], axis=-1)
    else:
        new_fea = grouped_xyz_norm

    new_points = sa_mlp_pallas(new_fea, weights, shifts)             # (B, S, Cout) f32
    return jnp.transpose(new_xyz, (0, 2, 1)), jnp.transpose(new_points, (0, 2, 1))


# ------------------------------- parameter init ---------------------------------------

def init_params(key, in_channel, mlp, eps=1e-5):
    """Deterministic Conv2d(1x1) + eval-mode BatchNorm2d params, folded so the
    kernel computes relu(X @ W' + shift) with W' = W * (gamma / sqrt(var+eps))."""
    weights, shifts = [], []
    last = in_channel
    for out_c in mlp:
        key, k1, k2, k3, k4, k5, k6 = jax.random.split(key, 7)
        w = 0.1 * jax.random.normal(k1, (last, out_c), jnp.float32)
        b_conv = 0.1 * jax.random.normal(k2, (out_c,), jnp.float32)
        gamma = 1.0 + 0.1 * jax.random.normal(k3, (out_c,), jnp.float32)
        beta = 0.1 * jax.random.normal(k4, (out_c,), jnp.float32)
        mean = 0.1 * jax.random.normal(k5, (out_c,), jnp.float32)
        var = 1.0 + jnp.abs(jax.random.normal(k6, (out_c,), jnp.float32))
        scale = gamma / jnp.sqrt(var + eps)
        shift = beta + scale * (b_conv - mean)
        weights.append(w * scale[None, :])       # fold BN scale into the conv weight
        shifts.append(shift)
        last = out_c
    return weights, shifts


def _mlp_reference(new_fea_kf, weights, shifts):
    # Pure-JAX reference of the kernel's math on the K-leading layout
    # (bf16 matmul operands, f32 epilogue, max over neighbors).
    n = len(weights)
    h = new_fea_kf.astype(jnp.bfloat16)
    for i, (w, sh) in enumerate(zip(weights, shifts)):
        acc = jnp.einsum("bksc,cd->bksd", h, w.astype(jnp.bfloat16),
                         preferred_element_type=jnp.float32)
        acc = jnp.maximum(acc + sh.reshape(1, 1, 1, -1), 0.0)
        h = acc if i == n - 1 else acc.astype(jnp.bfloat16)
    return jnp.max(h, axis=1)                                        # (B, S, Cout)


# ------------------------------------ main ---------------------------------------------

if __name__ == "__main__":
    key = jax.random.PRNGKey(0)
    B, N, D = 2, 16, 4          # batch, input points, input feature channels
    n_center, n_near = 8, 4     # sampled centers S, neighbors K
    in_channel = 3 + D          # grouped xyz (3) + features (D)
    mlp = [16, 32]

    k_xyz, k_pts, k_par = jax.random.split(key, 3)
    xyz = jax.random.normal(k_xyz, (B, 3, N), jnp.float32)      # PyTorch layout (B, 3, N)
    points = jax.random.normal(k_pts, (B, D, N), jnp.float32)   # PyTorch layout (B, D, N)

    weights, shifts = init_params(k_par, in_channel, mlp)

    new_xyz, new_points = jax.jit(
        lambda x, p: set_abstraction_forward(x, p, n_center, n_near, weights, shifts)
    )(xyz, points)
    jax.block_until_ready((new_xyz, new_points))

    assert new_xyz.shape == (B, 3, n_center)
    assert new_points.shape == (B, mlp[-1], n_center)

    # sanity check the Pallas MLP against a plain-JAX reference on the same grouping
    xyz_t = jnp.transpose(xyz, (0, 2, 1))
    fea_t = jnp.transpose(points, (0, 2, 1))
    idx_all = knn_idx(xyz_t, n_near)
    fps_idx = farthest_point_sample(xyz_t, n_center)
    c_xyz = index_points(xyz_t, fps_idx)
    idx = index_points(idx_all, fps_idx)
    idx_k = jnp.transpose(idx, (0, 2, 1))
    g_xyz = index_points(xyz_t, idx_k) - c_xyz[:, None, :, :]
    new_fea = jnp.concatenate([g_xyz, index_points(fea_t, idx_k)], axis=-1)
    ref = jnp.transpose(_mlp_reference(new_fea, weights, shifts), (0, 2, 1))
    assert jnp.allclose(new_points, ref, atol=1e-3, rtol=1e-3)

    print("KERNEL_OK")
</pallas_src>

<mosaic_0001>
module attributes {stable_mosaic.version = 11 : i64} {
  func.func @_sa_mlp_kernel(%arg0: i32, %arg1: i32, %arg2: memref<1x4x16x7xbf16, #tpu.memory_space<vmem>>, %arg3: memref<128x128xbf16, #tpu.memory_space<vmem>>, %arg4: memref<1x128xf32, #tpu.memory_space<vmem>>, %arg5: memref<128x128xbf16, #tpu.memory_space<vmem>>, %arg6: memref<1x128xf32, #tpu.memory_space<vmem>>, %arg7: memref<1x16x128xf32, #tpu.memory_space<vmem>>, %arg8: memref<16x128xbf16, #tpu.memory_space<vmem>>) attributes {dimension_semantics = [#tpu.dimension_semantics<parallel>, #tpu.dimension_semantics<parallel>], iteration_bounds = array<i64: 2, 1>, scalar_prefetch = 0 : i64, scratch_operands = 1 : i64, tpu.core_type = #tpu.core_type<tc>, window_params = [{transform_indices = @transform_0, window_bounds = array<i64: 1, 4, 16, 7>}, {pipeline_mode = #tpu.pipeline_mode<synchronous>, transform_indices = @transform_1, window_bounds = array<i64: 128, 128>}, {pipeline_mode = #tpu.pipeline_mode<synchronous>, transform_indices = @transform_2, window_bounds = array<i64: 1, 128>}, {pipeline_mode = #tpu.pipeline_mode<synchronous>, transform_indices = @transform_3, window_bounds = array<i64: 128, 128>}, {pipeline_mode = #tpu.pipeline_mode<synchronous>, transform_indices = @transform_4, window_bounds = array<i64: 1, 128>}, {transform_indices = @transform_5, window_bounds = array<i64: 1, 16, 128>}]} {
    %c0 = arith.constant 0 : index
    %c0_0 = arith.constant 0 : index
    %0 = vector.load %arg3[%c0, %c0_0] : memref<128x128xbf16, #tpu.memory_space<vmem>>, vector<128x128xbf16>
    %c0_1 = arith.constant 0 : index
    %c0_2 = arith.constant 0 : index
    %1 = vector.load %arg5[%c0_1, %c0_2] : memref<128x128xbf16, #tpu.memory_space<vmem>>, vector<128x128xbf16>
    %c0_3 = arith.constant 0 : index
    %c0_4 = arith.constant 0 : index
    %2 = vector.load %arg4[%c0_3, %c0_4] : memref<1x128xf32, #tpu.memory_space<vmem>>, vector<1x128xf32>
    %c0_5 = arith.constant 0 : index
    %c0_6 = arith.constant 0 : index
    %3 = vector.load %arg6[%c0_5, %c0_6] : memref<1x128xf32, #tpu.memory_space<vmem>>, vector<1x128xf32>
    %cst = arith.constant 0.000000e+00 : bf16
    %4 = vector.broadcast %cst : bf16 to vector<16x128xbf16>
    %c0_7 = arith.constant 0 : index
    %c0_8 = arith.constant 0 : index
    %5 = vector.load %arg8[%c0_7, %c0_8] : memref<16x128xbf16, #tpu.memory_space<vmem>>, vector<16x128xbf16>
    tpu.vector_store %arg8[%c0_7, %c0_8], %4 {strides = array<i32>} : memref<16x128xbf16, #tpu.memory_space<vmem>>, vector<16x128xbf16>,
    %c0_9 = arith.constant 0 : index
    %c0_10 = arith.constant 0 : index
    %c0_11 = arith.constant 0 : index
    %c0_12 = arith.constant 0 : index
    %6 = vector.load %arg2[%c0_9, %c0_10, %c0_11, %c0_12] : memref<1x4x16x7xbf16, #tpu.memory_space<vmem>>, vector<1x1x16x7xbf16>
    %7 = vector.shape_cast %6 : vector<1x1x16x7xbf16> to vector<16x7xbf16>
    %c0_13 = arith.constant 0 : index
    %c0_14 = arith.constant 0 : index
    %8 = vector.load %arg8[%c0_13, %c0_14] : memref<16x128xbf16, #tpu.memory_space<vmem>>, vector<16x7xbf16>
    tpu.vector_store %arg8[%c0_13, %c0_14], %7 {strides = array<i32>} : memref<16x128xbf16, #tpu.memory_space<vmem>>, vector<16x7xbf16>,
    %c0_15 = arith.constant 0 : index
    %c0_16 = arith.constant 0 : index
    %9 = vector.load %arg8[%c0_15, %c0_16] : memref<16x128xbf16, #tpu.memory_space<vmem>>, vector<16x128xbf16>
    %cst_17 = arith.constant dense<0.000000e+00> : vector<16x128xf32>
    %10 = tpu.matmul %9, %0, %cst_17 {dimension_numbers = #tpu.dot_dimension_numbers<[1], [0], [0], [1], [0, 0, 1, 1], [], []>} : vector<16x128xbf16>, vector<128x128xbf16>, vector<16x128xf32> -> vector<16x128xf32>
    %11 = vector.broadcast %2 : vector<1x128xf32> to vector<16x128xf32>
    %12 = arith.addf %10, %11 : vector<16x128xf32>
    %cst_18 = arith.constant 0.000000e+00 : f32
    %13 = vector.broadcast %cst_18 : f32 to vector<16x128xf32>
    %14 = arith.maximumf %12, %13 : vector<16x128xf32>
    %15 = arith.truncf %14 : vector<16x128xf32> to vector<16x128xbf16>
    %cst_19 = arith.constant dense<0.000000e+00> : vector<16x128xf32>
    %16 = tpu.matmul %15, %1, %cst_19 {dimension_numbers = #tpu.dot_dimension_numbers<[1], [0], [0], [1], [0, 0, 1, 1], [], []>} : vector<16x128xbf16>, vector<128x128xbf16>, vector<16x128xf32> -> vector<16x128xf32>
    %17 = vector.broadcast %3 : vector<1x128xf32> to vector<16x128xf32>
    %18 = arith.addf %16, %17 : vector<16x128xf32>
    %cst_20 = arith.constant 0.000000e+00 : f32
    %19 = vector.broadcast %cst_20 : f32 to vector<16x128xf32>
    %20 = arith.maximumf %18, %19 : vector<16x128xf32>
    %c0_21 = arith.constant 0 : index
    %c1 = arith.constant 1 : index
    %c0_22 = arith.constant 0 : index
    %c0_23 = arith.constant 0 : index
    %21 = vector.load %arg2[%c0_21, %c1, %c0_22, %c0_23] : memref<1x4x16x7xbf16, #tpu.memory_space<vmem>>, vector<1x1x16x7xbf16>
    %22 = vector.shape_cast %21 : vector<1x1x16x7xbf16> to vector<16x7xbf16>
    %c0_24 = arith.constant 0 : index
    %c0_25 = arith.constant 0 : index
    %23 = vector.load %arg8[%c0_24, %c0_25] : memref<16x128xbf16, #tpu.memory_space<vmem>>, vector<16x7xbf16>
    tpu.vector_store %arg8[%c0_24, %c0_25], %22 {strides = array<i32>} : memref<16x128xbf16, #tpu.memory_space<vmem>>, vector<16x7xbf16>,
    %c0_26 = arith.constant 0 : index
    %c0_27 = arith.constant 0 : index
    %24 = vector.load %arg8[%c0_26, %c0_27] : memref<16x128xbf16, #tpu.memory_space<vmem>>, vector<16x128xbf16>
    %cst_28 = arith.constant dense<0.000000e+00> : vector<16x128xf32>
    %25 = tpu.matmul %24, %0, %cst_28 {dimension_numbers = #tpu.dot_dimension_numbers<[1], [0], [0], [1], [0, 0, 1, 1], [], []>} : vector<16x128xbf16>, vector<128x128xbf16>, vector<16x128xf32> -> vector<16x128xf32>
    %26 = vector.broadcast %2 : vector<1x128xf32> to vector<16x128xf32>
    %27 = arith.addf %25, %26 : vector<16x128xf32>
    %cst_29 = arith.constant 0.000000e+00 : f32
    %28 = vector.broadcast %cst_29 : f32 to vector<16x128xf32>
    %29 = arith.maximumf %27, %28 : vector<16x128xf32>
    %30 = arith.truncf %29 : vector<16x128xf32> to vector<16x128xbf16>
    %cst_30 = arith.constant dense<0.000000e+00> : vector<16x128xf32>
    %31 = tpu.matmul %30, %1, %cst_30 {dimension_numbers = #tpu.dot_dimension_numbers<[1], [0], [0], [1], [0, 0, 1, 1], [], []>} : vector<16x128xbf16>, vector<128x128xbf16>, vector<16x128xf32> -> vector<16x128xf32>
    %32 = vector.broadcast %3 : vector<1x128xf32> to vector<16x128xf32>
    %33 = arith.addf %31, %32 : vector<16x128xf32>
    %cst_31 = arith.constant 0.000000e+00 : f32
    %34 = vector.broadcast %cst_31 : f32 to vector<16x128xf32>
    %35 = arith.maximumf %33, %34 : vector<16x128xf32>
    %36 = arith.maximumf %20, %35 : vector<16x128xf32>
    %c0_32 = arith.constant 0 : index
    %c2 = arith.constant 2 : index
    %c0_33 = arith.constant 0 : index
    %c0_34 = arith.constant 0 : index
    %37 = vector.load %arg2[%c0_32, %c2, %c0_33, %c0_34] : memref<1x4x16x7xbf16, #tpu.memory_space<vmem>>, vector<1x1x16x7xbf16>
    %38 = vector.shape_cast %37 : vector<1x1x16x7xbf16> to vector<16x7xbf16>
    %c0_35 = arith.constant 0 : index
    %c0_36 = arith.constant 0 : index
    %39 = vector.load %arg8[%c0_35, %c0_36] : memref<16x128xbf16, #tpu.memory_space<vmem>>, vector<16x7xbf16>
    tpu.vector_store %arg8[%c0_35, %c0_36], %38 {strides = array<i32>} : memref<16x128xbf16, #tpu.memory_space<vmem>>, vector<16x7xbf16>,
    %c0_37 = arith.constant 0 : index
    %c0_38 = arith.constant 0 : index
    %40 = vector.load %arg8[%c0_37, %c0_38] : memref<16x128xbf16, #tpu.memory_space<vmem>>, vector<16x128xbf16>
    %cst_39 = arith.constant dense<0.000000e+00> : vector<16x128xf32>
    %41 = tpu.matmul %40, %0, %cst_39 {dimension_numbers = #tpu.dot_dimension_numbers<[1], [0], [0], [1], [0, 0, 1, 1], [], []>} : vector<16x128xbf16>, vector<128x128xbf16>, vector<16x128xf32> -> vector<16x128xf32>
    %42 = vector.broadcast %2 : vector<1x128xf32> to vector<16x128xf32>
    %43 = arith.addf %41, %42 : vector<16x128xf32>
    %cst_40 = arith.constant 0.000000e+00 : f32
    %44 = vector.broadcast %cst_40 : f32 to vector<16x128xf32>
    %45 = arith.maximumf %43, %44 : vector<16x128xf32>
    %46 = arith.truncf %45 : vector<16x128xf32> to vector<16x128xbf16>
    %cst_41 = arith.constant dense<0.000000e+00> : vector<16x128xf32>
    %47 = tpu.matmul %46, %1, %cst_41 {dimension_numbers = #tpu.dot_dimension_numbers<[1], [0], [0], [1], [0, 0, 1, 1], [], []>} : vector<16x128xbf16>, vector<128x128xbf16>, vector<16x128xf32> -> vector<16x128xf32>
    %48 = vector.broadcast %3 : vector<1x128xf32> to vector<16x128xf32>
    %49 = arith.addf %47, %48 : vector<16x128xf32>
    %cst_42 = arith.constant 0.000000e+00 : f32
    %50 = vector.broadcast %cst_42 : f32 to vector<16x128xf32>
    %51 = arith.maximumf %49, %50 : vector<16x128xf32>
    %52 = arith.maximumf %36, %51 : vector<16x128xf32>
    %c0_43 = arith.constant 0 : index
    %c3 = arith.constant 3 : index
    %c0_44 = arith.constant 0 : index
    %c0_45 = arith.constant 0 : index
    %53 = vector.load %arg2[%c0_43, %c3, %c0_44, %c0_45] : memref<1x4x16x7xbf16, #tpu.memory_space<vmem>>, vector<1x1x16x7xbf16>
    %54 = vector.shape_cast %53 : vector<1x1x16x7xbf16> to vector<16x7xbf16>
    %c0_46 = arith.constant 0 : index
    %c0_47 = arith.constant 0 : index
    %55 = vector.load %arg8[%c0_46, %c0_47] : memref<16x128xbf16, #tpu.memory_space<vmem>>, vector<16x7xbf16>
    tpu.vector_store %arg8[%c0_46, %c0_47], %54 {strides = array<i32>} : memref<16x128xbf16, #tpu.memory_space<vmem>>, vector<16x7xbf16>,
    %c0_48 = arith.constant 0 : index
    %c0_49 = arith.constant 0 : index
    %56 = vector.load %arg8[%c0_48, %c0_49] : memref<16x128xbf16, #tpu.memory_space<vmem>>, vector<16x128xbf16>
    %cst_50 = arith.constant dense<0.000000e+00> : vector<16x128xf32>
    %57 = tpu.matmul %56, %0, %cst_50 {dimension_numbers = #tpu.dot_dimension_numbers<[1], [0], [0], [1], [0, 0, 1, 1], [], []>} : vector<16x128xbf16>, vector<128x128xbf16>, vector<16x128xf32> -> vector<16x128xf32>
    %58 = vector.broadcast %2 : vector<1x128xf32> to vector<16x128xf32>
    %59 = arith.addf %57, %58 : vector<16x128xf32>
    %cst_51 = arith.constant 0.000000e+00 : f32
    %60 = vector.broadcast %cst_51 : f32 to vector<16x128xf32>
    %61 = arith.maximumf %59, %60 : vector<16x128xf32>
    %62 = arith.truncf %61 : vector<16x128xf32> to vector<16x128xbf16>
    %cst_52 = arith.constant dense<0.000000e+00> : vector<16x128xf32>
    %63 = tpu.matmul %62, %1, %cst_52 {dimension_numbers = #tpu.dot_dimension_numbers<[1], [0], [0], [1], [0, 0, 1, 1], [], []>} : vector<16x128xbf16>, vector<128x128xbf16>, vector<16x128xf32> -> vector<16x128xf32>
    %64 = vector.broadcast %3 : vector<1x128xf32> to vector<16x128xf32>
    %65 = arith.addf %63, %64 : vector<16x128xf32>
    %cst_53 = arith.constant 0.000000e+00 : f32
    %66 = vector.broadcast %cst_53 : f32 to vector<16x128xf32>
    %67 = arith.maximumf %65, %66 : vector<16x128xf32>
    %68 = arith.maximumf %52, %67 : vector<16x128xf32>
    %69 = vector.shape_cast %68 : vector<16x128xf32> to vector<1x16x128xf32>
    %c0_54 = arith.constant 0 : index
    %c0_55 = arith.constant 0 : index
    %c0_56 = arith.constant 0 : index
    %70 = vector.load %arg7[%c0_54, %c0_55, %c0_56] : memref<1x16x128xf32, #tpu.memory_space<vmem>>, vector<1x16x128xf32>
    tpu.vector_store %arg7[%c0_54, %c0_55, %c0_56], %69 {strides = array<i32>} : memref<1x16x128xf32, #tpu.memory_space<vmem>>, vector<1x16x128xf32>,
    return
  }
  func.func @transform_0(%arg0: i32, %arg1: i32) -> (i32, i32, i32, i32) {
    %c0_i32 = arith.constant 0 : i32
    %c0_i32_0 = arith.constant 0 : i32
    %c0_i32_1 = arith.constant 0 : i32
    return %arg0, %c0_i32, %arg1, %c0_i32_0 : i32, i32, i32, i32
  }
  func.func @transform_1(%arg0: i32, %arg1: i32) -> (i32, i32) {
    %c0_i32 = arith.constant 0 : i32
    %c0_i32_0 = arith.constant 0 : i32
    %c0_i32_1 = arith.constant 0 : i32
    return %c0_i32, %c0_i32_0 : i32, i32
  }
  func.func @transform_2(%arg0: i32, %arg1: i32) -> (i32, i32) {
    %c0_i32 = arith.constant 0 : i32
    %c0_i32_0 = arith.constant 0 : i32
    %c0_i32_1 = arith.constant 0 : i32
    return %c0_i32, %c0_i32_0 : i32, i32
  }
  func.func @transform_3(%arg0: i32, %arg1: i32) -> (i32, i32) {
    %c0_i32 = arith.constant 0 : i32
    %c0_i32_0 = arith.constant 0 : i32
    %c0_i32_1 = arith.constant 0 : i32
    return %c0_i32, %c0_i32_0 : i32, i32
  }
  func.func @transform_4(%arg0: i32, %arg1: i32) -> (i32, i32) {
    %c0_i32 = arith.constant 0 : i32
    %c0_i32_0 = arith.constant 0 : i32
    %c0_i32_1 = arith.constant 0 : i32
    return %c0_i32, %c0_i32_0 : i32, i32
  }
  func.func @transform_5(%arg0: i32, %arg1: i32) -> (i32, i32, i32) {
    %c0_i32 = arith.constant 0 : i32
    %c0_i32_0 = arith.constant 0 : i32
    return %arg0, %arg1, %c0_i32 : i32, i32, i32
  }
}

</mosaic_0001>

<llo_original>
// kernel: custom-call.10
$region0: #{custom-call.10}
  %s0 = inlined_call_operand.vmem [shape: f32[2,16], index: 0, kind: output, shape index: {}]

// kernel: _lambda_.1
$region0: #{_lambda_.1}
  #allocation0 [shape = 'u32[]', space=smem, size = 0x4, offset = 0x4, fixed_abs, tag = 'smem constant byte address 0x4 - core index']
  #allocation1 [shape = 'u32[72,128]{1,0:T(1,128)}', space=vmem, size = 0x9000, scoped, tag = 'internal scratch']
  #allocation2 [shape = 'bf16[16,128]{1,0:T(8,128)(2,1)}', space=vmem, size = 0x1000, scoped, tag = 'scratch operand']
  %s0 = inlined_call_operand.vmem [shape: bf16[2,4,16,7], index: 0, kind: input, shape index: {}]
  %s1 = inlined_call_operand.vmem [shape: bf16[128,128], index: 1, kind: input, shape index: {}]
  %s2 = inlined_call_operand.vmem [shape: f32[1,128], index: 2, kind: input, shape index: {}]
  %s3 = inlined_call_operand.vmem [shape: bf16[128,128], index: 3, kind: input, shape index: {}]
  %s4 = inlined_call_operand.vmem [shape: f32[1,128], index: 4, kind: input, shape index: {}]
  %s5 = inlined_call_operand.vmem [shape: f32[2,16,128], index: 5, kind: output, shape index: {}]
  %s6 = sld [smem:[#allocation0]]
  $region53: #{_lambda_.1} parent=0
    _
  %s8 = ssub.s32 1, %s6
  %s9 = scalar_select 0, %s8, %s6
  loop: start=0, step=1, limit=4
  $region2: #{_lambda_.1} parent=0 // loop_pre_header
    _
  $region3: #{_lambda_.1} parent=0 // loop_header
    %s11 = sphi 0, %s15
    %p12 = scmp.ge.s32.totalorder %s11, 4
    %s18 = sphi 0, %s30
    %s19 = sphi 0, %s26
    %s20 = sphi 0, %s18
    %s21 = sphi 0, %s19
    %s22 = sphi 0, %s20
    %s23 = sphi 0, %s21
    %s35 = sphi 0, %s37
    %s38 = sphi 0, %s35
    %s39 = sphi 0, %s38
    %s55 = sphi 0, %s39
    %s59 = sphi 0, %s59
    %s61 = sphi 0, %s59
    %s62 = sphi 0, %s61
    %s76 = sphi 0, %s62
    %s80 = sphi 0, %s80
    %s82 = sphi 0, %s80
    %s83 = sphi 0, %s82
    %s97 = sphi 0, %s83
    %s101 = sphi 0, %s101
    %s103 = sphi 0, %s101
    %s104 = sphi 0, %s103
    %s118 = sphi 0, %s104
    %s122 = sphi 0, %s122
    %s124 = sphi 0, %s122
    %s125 = sphi 0, %s124
    %s139 = sphi 0, %s125
    %s147 = sphi 0, %s149
    %s150 = sphi 0, %s147
    %s151 = sphi 0, %s150
    %s167 = sphi 0, %s151
  $region4: #{_lambda_.1} parent=0 // loop_header_branch
    %14 = sbr.rel (%p12) target = $region8
  $region5: #{_lambda_.1} parent=0 // loop_body
    %s16 = ssub.s32 %s11, 1
    %s17 = ssub.s32 %s11, 2
    %s24 = sadd.s32 1, %s19
    %p25 = scmp.ge.s32.totalorder %s24, 1
    %s26 = scalar_select %p25, 0, %s24
    %s27 = sadd.s32 1, %s18
    %s28 = scalar_select %p25, %s27, %s18
    %p29 = scmp.ge.s32.totalorder %s28, 2
    %s30 = scalar_select %p29, 0, %s28
    %s31 = ssub.s32 %s18, %s30
    %s32 = ssub.s32 %s19, %s26
    %s33 = sor.u32 %s31, %s32
    %p34 = scmp.eq.s32.totalorder %s33, 0
    %s36 = sadd.s32 %s35, 1
    %s37 = scalar_select %p34, %s35, %s36
    %p40 = pneg %p34
    %p41 = scmp.eq.s32.totalorder %s11, 1
    %p42 = por %p40, %p41
    %p43 = scmp.ne.s32.totalorder %s35, %s38
    %p44 = scmp.eq.s32.totalorder %s11, 0
    %p45 = por %p43, %p44
    %p46 = scmp.ne.s32.totalorder %s35, %s38
    %p47 = scmp.eq.s32.totalorder %s16, 1
    %p48 = por %p46, %p47
    %p49 = scmp.ne.s32.totalorder %s38, %s39
    %p50 = scmp.eq.s32.totalorder %s16, 0
    %p51 = por %p49, %p50
    %p52 = scmp.ne.s32.totalorder %s38, %s39
    %p53 = scmp.eq.s32.totalorder %s17, 1
    %p54 = por %p52, %p53
    %p56 = scmp.ne.s32.totalorder %s39, %s55
    %p57 = scmp.eq.s32.totalorder %s17, 0
    %p58 = por %p56, %p57
    %s60 = sadd.s32 %s59, 1
    %p63 = scmp.eq.s32.totalorder %s11, 1
    %p64 = scmp.ne.s32.totalorder %s59, %s61
    %p65 = scmp.eq.s32.totalorder %s11, 0
    %p66 = por %p64, %p65
    %p67 = scmp.ne.s32.totalorder %s59, %s61
    %p68 = scmp.eq.s32.totalorder %s16, 1
    %p69 = por %p67, %p68
    %p70 = scmp.ne.s32.totalorder %s61, %s62
    %p71 = scmp.eq.s32.totalorder %s16, 0
    %p72 = por %p70, %p71
    %p73 = scmp.ne.s32.totalorder %s61, %s62
    %p74 = scmp.eq.s32.totalorder %s17, 1
    %p75 = por %p73, %p74
    %p77 = scmp.ne.s32.totalorder %s62, %s76
    %p78 = scmp.eq.s32.totalorder %s17, 0
    %p79 = por %p77, %p78
    %s81 = sadd.s32 %s80, 1
    %p84 = scmp.eq.s32.totalorder %s11, 1
    %p85 = scmp.ne.s32.totalorder %s80, %s82
    %p86 = scmp.eq.s32.totalorder %s11, 0
    %p87 = por %p85, %p86
    %p88 = scmp.ne.s32.totalorder %s80, %s82
    %p89 = scmp.eq.s32.totalorder %s16, 1
    %p90 = por %p88, %p89
    %p91 = scmp.ne.s32.totalorder %s82, %s83
    %p92 = scmp.eq.s32.totalorder %s16, 0
    %p93 = por %p91, %p92
    %p94 = scmp.ne.s32.totalorder %s82, %s83
    %p95 = scmp.eq.s32.totalorder %s17, 1
    %p96 = por %p94, %p95
    %p98 = scmp.ne.s32.totalorder %s83, %s97
    %p99 = scmp.eq.s32.totalorder %s17, 0
    %p100 = por %p98, %p99
    %s102 = sadd.s32 %s101, 1
    %p105 = scmp.eq.s32.totalorder %s11, 1
    %p106 = scmp.ne.s32.totalorder %s101, %s103
    %p107 = scmp.eq.s32.totalorder %s11, 0
    %p108 = por %p106, %p107
    %p109 = scmp.ne.s32.totalorder %s101, %s103
    %p110 = scmp.eq.s32.totalorder %s16, 1
    %p111 = por %p109, %p110
    %p112 = scmp.ne.s32.totalorder %s103, %s104
    %p113 = scmp.eq.s32.totalorder %s16, 0
    %p114 = por %p112, %p113
    %p115 = scmp.ne.s32.totalorder %s103, %s104
    %p116 = scmp.eq.s32.totalorder %s17, 1
    %p117 = por %p115, %p116
    %p119 = scmp.ne.s32.totalorder %s104, %s118
    %p120 = scmp.eq.s32.totalorder %s17, 0
    %p121 = por %p119, %p120
    %s123 = sadd.s32 %s122, 1
    %p126 = scmp.eq.s32.totalorder %s11, 1
    %p127 = scmp.ne.s32.totalorder %s122, %s124
    %p128 = scmp.eq.s32.totalorder %s11, 0
    %p129 = por %p127, %p128
    %p130 = scmp.ne.s32.totalorder %s122, %s124
    %p131 = scmp.eq.s32.totalorder %s16, 1
    %p132 = por %p130, %p131
    %p133 = scmp.ne.s32.totalorder %s124, %s125
    %p134 = scmp.eq.s32.totalorder %s16, 0
    %p135 = por %p133, %p134
    %p136 = scmp.ne.s32.totalorder %s124, %s125
    %p137 = scmp.eq.s32.totalorder %s17, 1
    %p138 = por %p136, %p137
    %p140 = scmp.ne.s32.totalorder %s125, %s139
    %p141 = scmp.eq.s32.totalorder %s17, 0
    %p142 = por %p140, %p141
    %s143 = ssub.s32 %s18, %s30
    %s144 = ssub.s32 %s19, %s26
    %s145 = sor.u32 %s143, %s144
    %p146 = scmp.eq.s32.totalorder %s145, 0
    %s148 = sadd.s32 %s147, 1
    %s149 = scalar_select %p146, %s147, %s148
    %p152 = pneg %p146
    %p153 = scmp.eq.s32.totalorder %s11, 1
    %p154 = por %p152, %p153
    %p155 = scmp.ne.s32.totalorder %s147, %s150
    %p156 = scmp.eq.s32.totalorder %s11, 0
    %p157 = por %p155, %p156
    %p158 = scmp.ne.s32.totalorder %s147, %s150
    %p159 = scmp.eq.s32.totalorder %s16, 1
    %p160 = por %p158, %p159
    %p161 = scmp.ne.s32.totalorder %s150, %s151
    %p162 = scmp.eq.s32.totalorder %s16, 0
    %p163 = por %p161, %p162
    %p164 = scmp.ne.s32.totalorder %s150, %s151
    %p165 = scmp.eq.s32.totalorder %s17, 1
    %p166 = por %p164, %p165
    %p168 = scmp.ne.s32.totalorder %s151, %s167
    %p169 = scmp.eq.s32.totalorder %s17, 0
    %p170 = por %p168, %p169
    %p171 = scmp.le.s32.totalorder 1, %s11
    %p172 = scmp.lt.s32.totalorder %s11, 3
    %p173 = pnand %p171, %p172
    %p174 = pneg %p173
    // Predicated region
    $region9: #{_lambda_.1} parent=5 // pred_check
      _
    $region10: #{_lambda_.1} parent=5 // pred_check_branch
      %176 = sbr.rel (%p173) target = $region12
    $region11: #{_lambda_.1} parent=5 // pred_region
      %s177 = ssub.s32 %s11, 1
      // Predicated region
      $region13: #{_lambda_.1} parent=11 // pred_check
        %p178 = pneg %p72
      $region14: #{_lambda_.1} parent=11 // pred_check_branch
        %180 = sbr.rel (%p178) target = $region16
      $region15: #{_lambda_.1} parent=11 // pred_region
        _
      $region16: #{_lambda_.1} parent=11 // pred_fallthru
        _
      // Predicated region
      $region17: #{_lambda_.1} parent=11 // pred_check
        %p181 = pneg %p93
      $region18: #{_lambda_.1} parent=11 // pred_check_branch
        %183 = sbr.rel (%p181) target = $region20
      $region19: #{_lambda_.1} parent=11 // pred_region
        _
      $region20: #{_lambda_.1} parent=11 // pred_fallthru
        _
      // Predicated region
      $region21: #{_lambda_.1} parent=11 // pred_check
        %p184 = pneg %p114
      $region22: #{_lambda_.1} parent=11 // pred_check_branch
        %186 = sbr.rel (%p184) target = $region24
      $region23: #{_lambda_.1} parent=11 // pred_region
        _
      $region24: #{_lambda_.1} parent=11 // pred_fallthru
        _
      // Predicated region
      $region25: #{_lambda_.1} parent=11 // pred_check
        %p187 = pneg %p135
      $region26: #{_lambda_.1} parent=11 // pred_check_branch
        %189 = sbr.rel (%p187) target = $region28
      $region27: #{_lambda_.1} parent=11 // pred_region
        _
      $region28: #{_lambda_.1} parent=11 // pred_fallthru
        _
    $region12: #{_lambda_.1} parent=5 // pred_fallthru
      _
    %p190 = scmp.lt.s32.totalorder %s11, 2
    // Predicated region
    $region29: #{_lambda_.1} parent=5 // pred_check
      %p191 = pneg %p190
    $region30: #{_lambda_.1} parent=5 // pred_check_branch
      %193 = sbr.rel (%p191) target = $region32
    $region31: #{_lambda_.1} parent=5 // pred_region
      // Predicated region
      $region33: #{_lambda_.1} parent=31 // pred_check
        %p194 = pneg %p45
      $region34: #{_lambda_.1} parent=31 // pred_check_branch
        %196 = sbr.rel (%p194) target = $region36
      $region35: #{_lambda_.1} parent=31 // pred_region
        %s197 = smul.u32 2, %s19
        %p198 = scmp.lt.s32.totalorder %s18, 1
        %s199 = scalar_select %p198, %s18, 1
        %p200 = scmp.lt.s32.totalorder %s197, 1
        %s201 = scalar_select %p200, %s197, 1
        %s202 = smul.addr %s199, 8
        %s203 = sadd.s32 %s201, %s202
        %s204 = smul.addr %s203, 4
        %s205 = scalar_lea.vmem %s0, %s204
        %s206 = smul.u32 2, %s19
      $region36: #{_lambda_.1} parent=31 // pred_fallthru
        _
    $region32: #{_lambda_.1} parent=5 // pred_fallthru
      _
    %p207 = scmp.le.s32.totalorder 1, %s11
    %p208 = scmp.lt.s32.totalorder %s11, 3
    %p209 = pnand %p207, %p208
    %p210 = pneg %p209
    // Predicated region
    $region37: #{_lambda_.1} parent=5 // pred_check
      _
    $region38: #{_lambda_.1} parent=5 // pred_check_branch
      %212 = sbr.rel (%p209) target = $region40
    $region39: #{_lambda_.1} parent=5 // pred_region
      %s213 = ssub.s32 %s11, 1
      %s214 = smul.u32 2, %s21
      %p215 = scmp.lt.s32.totalorder %s20, 1
      %s216 = scalar_select %p215, %s20, 1
      %p217 = scmp.lt.s32.totalorder %s214, 1
      %s218 = scalar_select %p217, %s214, 1
      %s219 = smul.addr %s216, 8
      %s220 = sadd.s32 %s218, %s219
      %s221 = smul.addr %s220, 4
      %s222 = scalar_lea.vmem %s0, %s221
      %p223 = pneg %p51
      %p224 = pneg %p48
      %p225 = pneg %p72
      %p226 = pneg %p69
      %p227 = pneg %p93
      %p228 = pneg %p90
      %p229 = pneg %p114
      %p230 = pneg %p111
      %p231 = pneg %p135
      %p232 = pneg %p132
      %p233 = pneg %p163
      %p234 = pneg %p160
      %s235 = smul.u32 2, %s21
      %p236 = scmp.lt.s32.totalorder %s20, 1
      %s237 = scalar_select %p236, %s20, 1
      %p238 = scmp.lt.s32.totalorder %s235, 1
      %s239 = scalar_select %p238, %s235, 1
      %s240 = smul.addr %s237, 2
      %s241 = sadd.s32 %s239, %s240
      %s242 = smul.addr %s241, 8
      %s243 = scalar_lea.vmem %s5, %s242
      %s244 = smul.u32 2, %s21
      %p245 = scmp.lt.s32.totalorder %s20, 1
      %s246 = scalar_select %p245, %s20, 1
      %p247 = scmp.lt.s32.totalorder %s244, 1
      %s248 = scalar_select %p247, %s244, 1
      %s249 = smul.addr %s246, 8
      %s250 = sadd.s32 %s248, %s249
      %s251 = smul.addr %s250, 4
      %s252 = scalar_lea.vmem %s0, %s251
      %s253 = smul.u32 2, %s21
      %s254 = smul.u32 2, %s21
      %p255 = scmp.lt.s32.totalorder %s20, 1
      %s256 = scalar_select %p255, %s20, 1
      %p257 = scmp.lt.s32.totalorder %s254, 1
      %s258 = scalar_select %p257, %s254, 1
      %s259 = smul.addr %s256, 2
      %s260 = sadd.s32 %s258, %s259
      %s261 = smul.addr %s260, 8
      %s262 = scalar_lea.vmem %s5, %s261
      %s263 = smul.u32 2, %s21
      %v265 = vld [vmem:[%s1] sm:$0xf]
      %v266 = vld [vmem:[%s1 + $0x4] sm:$0xf]
      %v267 = vld [vmem:[%s1 + $0x8] sm:$0xf]
      %v268 = vld [vmem:[%s1 + $0xc] sm:$0xf]
      %v269 = vld [vmem:[%s1 + $0x10] sm:$0xf]
      %v270 = vld [vmem:[%s1 + $0x14] sm:$0xf]
      %v271 = vld [vmem:[%s1 + $0x18] sm:$0xf]
      %v272 = vld [vmem:[%s1 + $0x1c] sm:$0xf]
      %v273 = vld [vmem:[%s1 + $0x20] sm:$0xf]
      %v274 = vld [vmem:[%s1 + $0x24] sm:$0xf]
      %v275 = vld [vmem:[%s1 + $0x28] sm:$0xf]
      %v276 = vld [vmem:[%s1 + $0x2c] sm:$0xf]
      %v277 = vld [vmem:[%s1 + $0x30] sm:$0xf]
      %v278 = vld [vmem:[%s1 + $0x34] sm:$0xf]
      %v279 = vld [vmem:[%s1 + $0x38] sm:$0xf]
      %v280 = vld [vmem:[%s1 + $0x3c] sm:$0xf]
      %v281 = vld [vmem:[%s3] sm:$0xf]
      %v282 = vld [vmem:[%s3 + $0x4] sm:$0xf]
      %v283 = vld [vmem:[%s3 + $0x8] sm:$0xf]
      %v284 = vld [vmem:[%s3 + $0xc] sm:$0xf]
      %v285 = vld [vmem:[%s3 + $0x10] sm:$0xf]
      %v286 = vld [vmem:[%s3 + $0x14] sm:$0xf]
      %v287 = vld [vmem:[%s3 + $0x18] sm:$0xf]
      %v288 = vld [vmem:[%s3 + $0x1c] sm:$0xf]
      %v289 = vld [vmem:[%s3 + $0x20] sm:$0xf]
      %v290 = vld [vmem:[%s3 + $0x24] sm:$0xf]
      %v291 = vld [vmem:[%s3 + $0x28] sm:$0xf]
      %v292 = vld [vmem:[%s3 + $0x2c] sm:$0xf]
      %v293 = vld [vmem:[%s3 + $0x30] sm:$0xf]
      %v294 = vld [vmem:[%s3 + $0x34] sm:$0xf]
      %v295 = vld [vmem:[%s3 + $0x38] sm:$0xf]
      %v296 = vld [vmem:[%s3 + $0x3c] sm:$0xf]
      %v297 = vld [vmem:[%s2] sm:$0x1]
      %v298 = vld [vmem:[%s4] sm:$0x1]
      %299 = vst [vmem:[#allocation2] sm:$0xf] 0
      %300 = vst [vmem:[#allocation2 + $0x4] sm:$0xf] 0
      %v301 = vld [vmem:[%s252] sm:$0xf]
      %v302 = vld [vmem:[%s252 + $0x4] sm:$0xf]
      %vm303 = vcmask 52224
      %304 = vst.msk [vmem:[#allocation2] sm:$0xf] %vm303, %v301
      %305 = vst.msk [vmem:[#allocation2 + $0x4] sm:$0xf] %vm303, %v302
      %v306 = vld [vmem:[#allocation2] sm:$0xf]
      %v307 = vld [vmem:[#allocation2 + $0x4] sm:$0xf]
      %v309 = vperm.slane %v297, 0
      %v313 = vunpack.c.l.b16 %v306
      %v314 = vunpack.c.l.b16 %v307
      %v315 = vpack.c.b16 %v314, %v313
      %v333 = vunpack.c.l.b16 %v265
      %v334 = vunpack.c.l.b16 %v266
      %v335 = vunpack.c.l.b16 %v267
      %v336 = vunpack.c.l.b16 %v268
      %v337 = vunpack.c.l.b16 %v269
      %v338 = vunpack.c.l.b16 %v270
      %v339 = vunpack.c.l.b16 %v271
      %v340 = vunpack.c.l.b16 %v272
      %v341 = vunpack.c.l.b16 %v273
      %v342 = vunpack.c.l.b16 %v274
      %v343 = vunpack.c.l.b16 %v275
      %v344 = vunpack.c.l.b16 %v276
      %v345 = vunpack.c.l.b16 %v277
      %v346 = vunpack.c.l.b16 %v278
      %v347 = vunpack.c.l.b16 %v279
      %v348 = vunpack.c.l.b16 %v280
      %v349 = vpack.c.b16 %v334, %v333
      %v350 = vpack.c.b16 %v336, %v335
      %v351 = vpack.c.b16 %v338, %v337
      %v352 = vpack.c.b16 %v340, %v339
      %v353 = vpack.c.b16 %v342, %v341
      %v354 = vpack.c.b16 %v344, %v343
      %v355 = vpack.c.b16 %v346, %v345
      %v356 = vpack.c.b16 %v348, %v347
      %365 = vmatpush.bf16.msra.mxu0 %v356
      %366 = vmatpush.bf16.msra.mxu0 %v355
      %367 = vmatpush.bf16.msra.mxu0 %v354
      %368 = vmatpush.bf16.msra.mxu0 %v353
      %369 = vmatpush.bf16.msra.mxu0 %v352
      %370 = vmatpush.bf16.msra.mxu0 %v351
      %371 = vmatpush.bf16.msra.mxu0 %v350
      %372 = vmatpush.bf16.msra.mxu0 %v349
      %373 = vmatmul.bf16.gmra.mxu0 %v315
      %v374 = vpop.f32.mrf.mxu0
      %v375 = vadd.f32 %v309, %v374
      %v376 = vpop.f32.mrf.mxu0
      %v377 = vadd.f32 %v309, %v376
      %378 = vdwg.mxu0
      %v379 = vmax.f32 %v375, 0.0
      %v380 = vmax.f32 %v377, 0.0
      %v381 = vpack.c.bf16 %v380, %v379
      %v383 = vperm.slane %v298, 0
      %v401 = vunpack.c.l.b16 %v281
      %v402 = vunpack.c.l.b16 %v282
      %v403 = vunpack.c.l.b16 %v283
      %v404 = vunpack.c.l.b16 %v284
      %v405 = vunpack.c.l.b16 %v285
      %v406 = vunpack.c.l.b16 %v286
      %v407 = vunpack.c.l.b16 %v287
      %v408 = vunpack.c.l.b16 %v288
      %v409 = vunpack.c.l.b16 %v289
      %v410 = vunpack.c.l.b16 %v290
      %v411 = vunpack.c.l.b16 %v291
      %v412 = vunpack.c.l.b16 %v292
      %v413 = vunpack.c.l.b16 %v293
      %v414 = vunpack.c.l.b16 %v294
      %v415 = vunpack.c.l.b16 %v295
      %v416 = vunpack.c.l.b16 %v296
      %v417 = vpack.c.b16 %v402, %v401
      %v418 = vpack.c.b16 %v404, %v403
      %v419 = vpack.c.b16 %v406, %v405
      %v420 = vpack.c.b16 %v408, %v407
      %v421 = vpack.c.b16 %v410, %v409
      %v422 = vpack.c.b16 %v412, %v411
      %v423 = vpack.c.b16 %v414, %v413
      %v424 = vpack.c.b16 %v416, %v415
      %433 = vmatpush.bf16.msra.mxu0 %v424
      %434 = vmatpush.bf16.msra.mxu0 %v423
      %435 = vmatpush.bf16.msra.mxu0 %v422
      %436 = vmatpush.bf16.msra.mxu0 %v421
      %437 = vmatpush.bf16.msra.mxu0 %v420
      %438 = vmatpush.bf16.msra.mxu0 %v419
      %439 = vmatpush.bf16.msra.mxu0 %v418
      %440 = vmatpush.bf16.msra.mxu0 %v417
      %441 = vmatmul.bf16.gmra.mxu0 %v381
      %v442 = vpop.f32.mrf.mxu0
      %v443 = vadd.f32 %v383, %v442
      %v444 = vpop.f32.mrf.mxu0
      %v445 = vadd.f32 %v383, %v444
      %446 = vdwg.mxu0
      %v447 = vmax.f32 %v443, 0.0
      %v448 = vmax.f32 %v445, 0.0
      %s449 = scalar_lea.vmem %s252, 8
      %v450 = vld [vmem:[%s449] sm:$0xf]
      %v451 = vld [vmem:[%s449 + $0x4] sm:$0xf]
      %452 = vst.msk [vmem:[#allocation2] sm:$0xf] %vm303, %v450
      %453 = vst.msk [vmem:[#allocation2 + $0x4] sm:$0xf] %vm303, %v451
      %v454 = vld [vmem:[#allocation2] sm:$0xf]
      %v455 = vld [vmem:[#allocation2 + $0x4] sm:$0xf]
      %v458 = vunpack.c.l.b16 %v454
      %v459 = vunpack.c.l.b16 %v455
      %v460 = vpack.c.b16 %v459, %v458
      %462 = vmatpush.bf16.msra.mxu0 %v356
      %463 = vmatpush.bf16.msra.mxu0 %v355
      %464 = vmatpush.bf16.msra.mxu0 %v354
      %465 = vmatpush.bf16.msra.mxu0 %v353
      %466 = vmatpush.bf16.msra.mxu0 %v352
      %467 = vmatpush.bf16.msra.mxu0 %v351
      %468 = vmatpush.bf16.msra.mxu0 %v350
      %469 = vmatpush.bf16.msra.mxu0 %v349
      %470 = vmatmul.bf16.gmra.mxu0 %v460
      %v471 = vpop.f32.mrf.mxu0
      %v472 = vadd.f32 %v309, %v471
      %v473 = vpop.f32.mrf.mxu0
      %v474 = vadd.f32 %v309, %v473
      %475 = vdwg.mxu0
      %v476 = vmax.f32 %v472, 0.0
      %v477 = vmax.f32 %v474, 0.0
      %v478 = vpack.c.bf16 %v477, %v476
      %479 = vmatpush.bf16.msra.mxu0 %v424
      %480 = vmatpush.bf16.msra.mxu0 %v423
      %481 = vmatpush.bf16.msra.mxu0 %v422
      %482 = vmatpush.bf16.msra.mxu0 %v421
      %483 = vmatpush.bf16.msra.mxu0 %v420
      %484 = vmatpush.bf16.msra.mxu0 %v419
      %485 = vmatpush.bf16.msra.mxu0 %v418
      %486 = vmatpush.bf16.msra.mxu0 %v417
      %487 = vmatmul.bf16.gmra.mxu0 %v478
      %v488 = vpop.f32.mrf.mxu0
      %v489 = vadd.f32 %v383, %v488
      %v490 = vpop.f32.mrf.mxu0
      %v491 = vadd.f32 %v383, %v490
      %492 = vdwg.mxu0
      %v493 = vmax.f32 %v489, 0.0
      %v494 = vmax.f32 %v491, 0.0
      %v495 = vmax.f32 %v447, %v493
      %v496 = vmax.f32 %v448, %v494
      %s497 = scalar_lea.vmem %s252, 16
      %v498 = vld [vmem:[%s497] sm:$0xf]
      %v499 = vld [vmem:[%s497 + $0x4] sm:$0xf]
      %500 = vst.msk [vmem:[#allocation2] sm:$0xf] %vm303, %v498
      %501 = vst.msk [vmem:[#allocation2 + $0x4] sm:$0xf] %vm303, %v499
      %v502 = vld [vmem:[#allocation2] sm:$0xf]
      %v503 = vld [vmem:[#allocation2 + $0x4] sm:$0xf]
      %v506 = vunpack.c.l.b16 %v502
      %v507 = vunpack.c.l.b16 %v503
      %v508 = vpack.c.b16 %v507, %v506
      %510 = vmatpush.bf16.msra.mxu0 %v356
      %511 = vmatpush.bf16.msra.mxu0 %v355
      %512 = vmatpush.bf16.msra.mxu0 %v354
      %513 = vmatpush.bf16.msra.mxu0 %v353
      %514 = vmatpush.bf16.msra.mxu0 %v352
      %515 = vmatpush.bf16.msra.mxu0 %v351
      %516 = vmatpush.bf16.msra.mxu0 %v350
      %517 = vmatpush.bf16.msra.mxu0 %v349
      %518 = vmatmul.bf16.gmra.mxu0 %v508
      %v519 = vpop.f32.mrf.mxu0
      %v520 = vadd.f32 %v309, %v519
      %v521 = vpop.f32.mrf.mxu0
      %v522 = vadd.f32 %v309, %v521
      %523 = vdwg.mxu0
      %v524 = vmax.f32 %v520, 0.0
      %v525 = vmax.f32 %v522, 0.0
      %v526 = vpack.c.bf16 %v525, %v524
      %527 = vmatpush.bf16.msra.mxu0 %v424
      %528 = vmatpush.bf16.msra.mxu0 %v423
      %529 = vmatpush.bf16.msra.mxu0 %v422
      %530 = vmatpush.bf16.msra.mxu0 %v421
      %531 = vmatpush.bf16.msra.mxu0 %v420
      %532 = vmatpush.bf16.msra.mxu0 %v419
      %533 = vmatpush.bf16.msra.mxu0 %v418
      %534 = vmatpush.bf16.msra.mxu0 %v417
      %535 = vmatmul.bf16.gmra.mxu0 %v526
      %v536 = vpop.f32.mrf.mxu0
      %v537 = vadd.f32 %v383, %v536
      %v538 = vpop.f32.mrf.mxu0
      %v539 = vadd.f32 %v383, %v538
      %540 = vdwg.mxu0
      %v541 = vmax.f32 %v537, 0.0
      %v542 = vmax.f32 %v539, 0.0
      %v543 = vmax.f32 %v495, %v541
      %v544 = vmax.f32 %v496, %v542
      %s545 = scalar_lea.vmem %s252, 24
      %v546 = vld [vmem:[%s545] sm:$0xf]
      %v547 = vld [vmem:[%s545 + $0x4] sm:$0xf]
      %548 = vst.msk [vmem:[#allocation2] sm:$0xf] %vm303, %v546
      %549 = vst.msk [vmem:[#allocation2 + $0x4] sm:$0xf] %vm303, %v547
      %v550 = vld [vmem:[#allocation2] sm:$0xf]
      %v551 = vld [vmem:[#allocation2 + $0x4] sm:$0xf]
      %v554 = vunpack.c.l.b16 %v550
      %v555 = vunpack.c.l.b16 %v551
      %v556 = vpack.c.b16 %v555, %v554
      %558 = vmatpush.bf16.msra.mxu0 %v356
      %559 = vmatpush.bf16.msra.mxu0 %v355
      %560 = vmatpush.bf16.msra.mxu0 %v354
      %561 = vmatpush.bf16.msra.mxu0 %v353
      %562 = vmatpush.bf16.msra.mxu0 %v352
      %563 = vmatpush.bf16.msra.mxu0 %v351
      %564 = vmatpush.bf16.msra.mxu0 %v350
      %565 = vmatpush.bf16.msra.mxu0 %v349
      %566 = vmatmul.bf16.gmra.mxu0 %v556
      %v567 = vpop.f32.mrf.mxu0
      %v568 = vadd.f32 %v309, %v567
      %v569 = vpop.f32.mrf.mxu0
      %v570 = vadd.f32 %v309, %v569
      %571 = vdwg.mxu0
      %v572 = vmax.f32 %v568, 0.0
      %v573 = vmax.f32 %v570, 0.0
      %v574 = vpack.c.bf16 %v573, %v572
      %575 = vmatpush.bf16.msra.mxu0 %v424
      %576 = vmatpush.bf16.msra.mxu0 %v423
      %577 = vmatpush.bf16.msra.mxu0 %v422
      %578 = vmatpush.bf16.msra.mxu0 %v421
      %579 = vmatpush.bf16.msra.mxu0 %v420
      %580 = vmatpush.bf16.msra.mxu0 %v419
      %581 = vmatpush.bf16.msra.mxu0 %v418
      %582 = vmatpush.bf16.msra.mxu0 %v417
      %583 = vmatmul.bf16.gmra.mxu0 %v574
      %v584 = vpop.f32.mrf.mxu0
      %v585 = vadd.f32 %v383, %v584
      %v586 = vpop.f32.mrf.mxu0
      %v587 = vadd.f32 %v383, %v586
      %588 = vdwg.mxu0
      %v589 = vmax.f32 %v585, 0.0
      %v590 = vmax.f32 %v587, 0.0
      %v591 = vmax.f32 %v543, %v589
      %v592 = vmax.f32 %v544, %v590
      %593 = vst [vmem:[%s262] sm:$0xff] %v591
      %594 = vst [vmem:[%s262 + $0x8] sm:$0xff] %v592
      %s595 = smul.u32 2, %s21
      %p596 = scmp.lt.s32.totalorder %s20, 1
      %s597 = scalar_select %p596, %s20, 1
      %p598 = scmp.lt.s32.totalorder %s595, 1
      %s599 = scalar_select %p598, %s595, 1
      %s600 = smul.addr %s597, 2
      %s601 = sadd.s32 %s599, %s600
      %s602 = smul.addr %s601, 8
      %s603 = scalar_lea.vmem %s5, %s602
      // Predicated region
      $region41: #{_lambda_.1} parent=39 // pred_check
        %p604 = pneg %p160
      $region42: #{_lambda_.1} parent=39 // pred_check_branch
        %606 = sbr.rel (%p604) target = $region44
      $region43: #{_lambda_.1} parent=39 // pred_region
        %s607 = smul.u32 2, %s21
      $region44: #{_lambda_.1} parent=39 // pred_fallthru
        _
    $region40: #{_lambda_.1} parent=5 // pred_fallthru
      _
    %p608 = scmp.le.s32.totalorder 2, %s11
    // Predicated region
    $region45: #{_lambda_.1} parent=5 // pred_check
      %p609 = pneg %p608
    $region46: #{_lambda_.1} parent=5 // pred_check_branch
      %611 = sbr.rel (%p609) target = $region48
    $region47: #{_lambda_.1} parent=5 // pred_region
      %s612 = ssub.s32 %s11, 2
      // Predicated region
      $region49: #{_lambda_.1} parent=47 // pred_check
        %p613 = pneg %p166
      $region50: #{_lambda_.1} parent=47 // pred_check_branch
        %615 = sbr.rel (%p613) target = $region52
      $region51: #{_lambda_.1} parent=47 // pred_region
        %s616 = smul.u32 2, %s23
        %p617 = scmp.lt.s32.totalorder %s22, 1
        %s618 = scalar_select %p617, %s22, 1
        %p619 = scmp.lt.s32.totalorder %s616, 1
        %s620 = scalar_select %p619, %s616, 1
        %s621 = smul.addr %s618, 2
        %s622 = sadd.s32 %s620, %s621
        %s623 = smul.addr %s622, 8
        %s624 = scalar_lea.vmem %s5, %s623
      $region52: #{_lambda_.1} parent=47 // pred_fallthru
        _
    $region48: #{_lambda_.1} parent=5 // pred_fallthru
      _
  $region6: #{_lambda_.1} parent=0 // loop_footer
    %s15 = sadd.s32 1, %s11
  $region7: #{_lambda_.1} parent=0 // loop_footer_branch
    %10 = sbr.rel target = $region3
  $region8: #{_lambda_.1} parent=0 // loop_exit
    _

</llo_original>
